<compile_context>
chip_gen: v5e
topology: v5e:2x2
jax: 0.10.0
libtpu: 0.0.40
codegen_flags: <defaults>
</compile_context>

<pallas_src>
import functools

import jax
import jax.numpy as jnp
from jax.experimental import pallas as pl
from jax.experimental.pallas import tpu as pltpu

_LANE = 128


def _get_act(act_name):
    if act_name == "tanh":
        return jnp.tanh
    if act_name == "relu":
        return lambda v: jnp.maximum(v, 0.0)
    if act_name in ("sine", "sin"):
        return jnp.sin
    # TODO(synk): other rmnn INR activations (gauss, ...) not mapped.
    raise ValueError(f"unsupported act_name: {act_name!r}")


def _round_up(v, m):
    return ((v + m - 1) // m) * m


def _split_monoto_kernel(x_ref, w1_ref, b1_ref, wh_ref, bh_ref, wo_ref, bo_ref,
                         y_ref, *, num_hidden_layers, act_name):
    """One grid step == one M tile; all D sub-nets packed along sublanes.

    Transposed layout (samples along lanes):
      x_ref : (D,  TM)     w1_ref: (DH, D)       b1_ref: (DH, 1)
      h     : (DH, TM)     wh_ref: (L, DH, DH)   bh_ref: (L, DH, 1)
      y_ref : (D,  TM)     wo_ref: (D, DH)       bo_ref: (D, 1)
    |W| and the output normalisation are pre-folded into the weights.
    """
    act = _get_act(act_name)
    cdt = w1_ref.dtype          # compute dtype for MXU operands (f32 or bf16)

    x = x_ref[...].astype(cdt)                                   # (D, TM)
    h = act(jnp.dot(w1_ref[...], x, preferred_element_type=jnp.float32)
            + b1_ref[...])                                       # (DH, TM)
    for l in range(num_hidden_layers):
        h = act(jnp.dot(wh_ref[l], h.astype(cdt),
                        preferred_element_type=jnp.float32) + bh_ref[l])
    y = jnp.dot(wo_ref[...], h.astype(cdt),
                preferred_element_type=jnp.float32) + bo_ref[...]  # (D, TM)
    y_ref[...] = y.astype(y_ref.dtype)


def split_monoto_forward(x_list, params, *, monoto_mode=1, act_name="tanh",
                         tile_m=2048, compute_dtype=jnp.float32):
    """x_list: list of D arrays, each (N, 1) f32. Returns list of D (N, 1)."""
    w1, b1, wh, bh, wo, bo = params
    D, _, H = w1.shape
    DH = D * H
    L2 = wh.shape[1]
    N = x_list[0].shape[0]
    act = _get_act(act_name)

    maybe_abs = jnp.abs if monoto_mode == 1 else (lambda w: w)
    w1a = maybe_abs(w1[:, 0, :]).astype(jnp.float32)        # (D, H)
    wha = maybe_abs(wh).astype(jnp.float32)                 # (D, L2, H, H)
    woa = maybe_abs(wo[:, :, 0]).astype(jnp.float32)        # (D, H)
    b1f = b1[:, 0, :].astype(jnp.float32)                   # (D, H)
    bhf = bh[:, :, 0, :].astype(jnp.float32)                # (D, L2, H)
    bof = bo[:, 0, 0].astype(jnp.float32)                   # (D,)

    # --- ymax / ymin = INR(+1) / INR(-1), once, pure JAX (tiny) ---
    def inr_const(xval):
        h = act(xval * w1a + b1f)                            # (D, H)
        for l in range(L2):
            h = act(jnp.einsum("dh,dhk->dk", h, wha[:, l]) + bhf[:, l])
        return jnp.einsum("dh,dh->d", h, woa) + bof          # (D,)

    ymax = inr_const(1.0)
    ymin = inr_const(-1.0)
    # TODO(synk): no epsilon guard on (ymax - ymin), matching the reference;
    # with act='sine' the net is not monotone and this can be ~0.
    scale = 2.0 / (ymax - ymin)                              # (D,)

    # --- block-diagonal transposed weight packing, |W| + normalisation folded ---
    eye = jnp.eye(D, dtype=jnp.float32)
    w1t = (w1a[:, :, None] * eye[:, None, :]).reshape(DH, D)            # (DH, D)
    b1t = b1f.reshape(DH, 1)                                            # (DH, 1)
    wot = jnp.einsum("de,dj->dej", eye, woa * scale[:, None]).reshape(D, DH)
    bot = ((bof - ymin) * scale - 1.0).reshape(D, 1)                    # (D, 1)
    if L2 > 0:
        wht = jnp.einsum("de,dlji->ldiej", eye, wha).reshape(L2, DH, DH)
        bht = jnp.transpose(bhf, (1, 0, 2)).reshape(L2, DH, 1)
    else:  # dummy, never read (the in-kernel hidden loop is empty)
        wht = jnp.zeros((1, DH, DH), jnp.float32)
        bht = jnp.zeros((1, DH, 1), jnp.float32)
    L2e = wht.shape[0]

    # MXU operands in compute_dtype (bf16 recommended on v6e/v7x, f32 on v5e);
    # biases stay f32 and are added to the f32 accumulator.
    w1t = w1t.astype(compute_dtype)
    wht = wht.astype(compute_dtype)
    wot = wot.astype(compute_dtype)

    # --- lane-dense x packing: (D, N), lane-aligned M tiling ---
    x_pack = jnp.concatenate(
        [xi.astype(jnp.float32).reshape(1, N) for xi in x_list], axis=0)
    n_lane = _round_up(N, _LANE)
    if n_lane >= 2 * _LANE:
        # >= 2 grid steps so ("parallel",) can shard work across both v7x
        # TensorCores; prefer an even step count.
        steps = max(2, -(-n_lane // _round_up(tile_m, _LANE)))
        if steps % 2:
            steps += 1
        tm = _round_up(-(-n_lane // steps), _LANE)
    else:
        tm = n_lane
    grid_m = -(-n_lane // tm)
    mp = grid_m * tm
    x_pack = jnp.pad(x_pack, ((0, 0), (0, mp - N)))

    kernel = functools.partial(
        _split_monoto_kernel,
        num_hidden_layers=L2,
        act_name=act_name,
    )

    y = pl.pallas_call(
        kernel,
        out_shape=jax.ShapeDtypeStruct((D, mp), jnp.float32),
        grid=(grid_m,),
        in_specs=[
            pl.BlockSpec((D, tm), lambda i: (0, i)),            # x (streamed)
            pl.BlockSpec((DH, D), lambda i: (0, 0)),            # W1^T (resident)
            pl.BlockSpec((DH, 1), lambda i: (0, 0)),            # b1
            pl.BlockSpec((L2e, DH, DH), lambda i: (0, 0, 0)),   # hidden W^T
            pl.BlockSpec((L2e, DH, 1), lambda i: (0, 0, 0)),    # hidden b
            pl.BlockSpec((D, DH), lambda i: (0, 0)),            # Wo^T (norm folded)
            pl.BlockSpec((D, 1), lambda i: (0, 0)),             # bo  (norm folded)
        ],
        out_specs=pl.BlockSpec((D, tm), lambda i: (0, i)),
        compiler_params=pltpu.CompilerParams(
            dimension_semantics=("parallel",)),
    )(x_pack, w1t, b1t, wht, bht, wot, bot)

    # Contiguous (lane-dense) row slices, one per coordinate / sub-network.
    return [y[d, :N].reshape(N, 1) for d in range(D)]


def init_params(key, dim_in, dim_hidden, num_layers):
    """Deterministic PyTorch-Linear-style init (uniform ±1/sqrt(fan_in))."""
    L2 = max(num_layers - 2, 0)
    ks = jax.random.split(key, 6)

    def u(k, shape, fan_in):
        bound = 1.0 / jnp.sqrt(jnp.float32(fan_in))
        return jax.random.uniform(k, shape, jnp.float32, -bound, bound)

    w1 = u(ks[0], (dim_in, 1, dim_hidden), 1)
    b1 = u(ks[1], (dim_in, 1, dim_hidden), 1)
    wh = u(ks[2], (dim_in, L2, dim_hidden, dim_hidden), dim_hidden)
    bh = u(ks[3], (dim_in, L2, 1, dim_hidden), dim_hidden)
    wo = u(ks[4], (dim_in, dim_hidden, 1), dim_hidden)
    bo = u(ks[5], (dim_in, 1, 1), dim_hidden)
    return w1, b1, wh, bh, wo, bo


def _reference_forward(x_list, params, *, monoto_mode=1, act_name="tanh"):
    """Pure-JAX reference of the same semantics (for correctness checks)."""
    w1, b1, wh, bh, wo, bo = params
    act = _get_act(act_name)
    maybe_abs = jnp.abs if monoto_mode == 1 else (lambda w: w)

    def inr(i, xi):
        h = act(xi @ maybe_abs(w1[i]) + b1[i])
        for l in range(wh.shape[1]):
            h = act(h @ maybe_abs(wh[i, l]) + bh[i, l])
        return h @ maybe_abs(wo[i]) + bo[i]

    x_max = jnp.ones((1, 1), jnp.float32)
    x_min = -jnp.ones((1, 1), jnp.float32)
    out = []
    for i, xi in enumerate(x_list):
        ymax = inr(i, x_max)
        ymin = inr(i, x_min)
        out.append((inr(i, xi) - ymin) / (ymax - ymin) * 2.0 - 1.0)
    return out


if __name__ == "__main__":
    dim_in, dim_hidden, num_layers = 4, 32, 3            # D*H = 128 lanes
    key = jax.random.PRNGKey(0)
    kp, kx = jax.random.split(key)
    params = init_params(kp, dim_in, dim_hidden, num_layers)

    # --- small single-tile check (N=8) ---
    N = 8
    xk = jax.random.split(kx, dim_in)
    x_list = [jax.random.uniform(xk[i], (N, 1), jnp.float32, -1.0, 1.0)
              for i in range(dim_in)]
    out = split_monoto_forward(x_list, params, monoto_mode=1, act_name="tanh")
    out = [jax.block_until_ready(o) for o in out]
    ref = _reference_forward(x_list, params, monoto_mode=1)
    for o, r in zip(out, ref):
        assert o.shape == (N, 1)
        assert jnp.allclose(o, r, atol=5e-4, rtol=5e-4), \
            float(jnp.max(jnp.abs(o - r)))

    # --- multi-tile checks (tiling, padding, >= 2 grid steps, small tiles) ---
    N2 = 600
    xk2 = jax.random.split(jax.random.fold_in(kx, 1), dim_in)
    x_list2 = [jax.random.uniform(xk2[i], (N2, 1), jnp.float32, -1.0, 1.0)
               for i in range(dim_in)]
    ref2 = _reference_forward(x_list2, params, monoto_mode=1)
    for tm in (2048, 256):     # default adaptive (2-step) and small-tile path
        out2 = split_monoto_forward(x_list2, params, monoto_mode=1,
                                    act_name="tanh", tile_m=tm)
        out2 = [jax.block_until_ready(o) for o in out2]
        for o, r in zip(out2, ref2):
            assert o.shape == (N2, 1)
            assert jnp.allclose(o, r, atol=5e-4, rtol=5e-4), \
                float(jnp.max(jnp.abs(o - r)))

    # --- bf16 MXU operands (recommended on v6e/v7x; keep f32 on v5e) ---
    out3 = split_monoto_forward(x_list2, params, monoto_mode=1,
                                act_name="tanh", compute_dtype=jnp.bfloat16)
    out3 = [jax.block_until_ready(o) for o in out3]
    for o, r in zip(out3, ref2):
        assert bool(jnp.all(jnp.isfinite(o)))
        assert jnp.allclose(o, r, atol=5e-2, rtol=0), \
            float(jnp.max(jnp.abs(o - r)))

    print("KERNEL_OK")
</pallas_src>

<mosaic_0001>
module attributes {stable_mosaic.version = 11 : i64} {
  func.func @_split_monoto_kernel(%arg0: i32, %arg1: memref<4x128xf32, #tpu.memory_space<vmem>>, %arg2: memref<128x4xf32, #tpu.memory_space<vmem>>, %arg3: memref<128x1xf32, #tpu.memory_space<vmem>>, %arg4: memref<1x128x128xf32, #tpu.memory_space<vmem>>, %arg5: memref<1x128x1xf32, #tpu.memory_space<vmem>>, %arg6: memref<4x128xf32, #tpu.memory_space<vmem>>, %arg7: memref<4x1xf32, #tpu.memory_space<vmem>>, %arg8: memref<4x128xf32, #tpu.memory_space<vmem>>) attributes {dimension_semantics = [#tpu.dimension_semantics<parallel>], iteration_bounds = array<i64: 1>, scalar_prefetch = 0 : i64, scratch_operands = 0 : i64, tpu.core_type = #tpu.core_type<tc>, window_params = [{transform_indices = @transform_0, window_bounds = array<i64: 4, 128>}, {pipeline_mode = #tpu.pipeline_mode<synchronous>, transform_indices = @transform_1, window_bounds = array<i64: 128, 4>}, {pipeline_mode = #tpu.pipeline_mode<synchronous>, transform_indices = @transform_2, window_bounds = array<i64: 128, 1>}, {pipeline_mode = #tpu.pipeline_mode<synchronous>, transform_indices = @transform_3, window_bounds = array<i64: 1, 128, 128>}, {pipeline_mode = #tpu.pipeline_mode<synchronous>, transform_indices = @transform_4, window_bounds = array<i64: 1, 128, 1>}, {pipeline_mode = #tpu.pipeline_mode<synchronous>, transform_indices = @transform_5, window_bounds = array<i64: 4, 128>}, {pipeline_mode = #tpu.pipeline_mode<synchronous>, transform_indices = @transform_6, window_bounds = array<i64: 4, 1>}, {transform_indices = @transform_7, window_bounds = array<i64: 4, 128>}]} {
    %c0 = arith.constant 0 : index
    %c0_0 = arith.constant 0 : index
    %0 = vector.load %arg1[%c0, %c0_0] : memref<4x128xf32, #tpu.memory_space<vmem>>, vector<4x128xf32>
    %c0_1 = arith.constant 0 : index
    %c0_2 = arith.constant 0 : index
    %1 = vector.load %arg2[%c0_1, %c0_2] : memref<128x4xf32, #tpu.memory_space<vmem>>, vector<128x4xf32>
    %cst = arith.constant dense<0.000000e+00> : vector<128x128xf32>
    %2 = tpu.matmul %1, %0, %cst {dimension_numbers = #tpu.dot_dimension_numbers<[1], [0], [0], [1], [0, 0, 1, 1], [], []>} : vector<128x4xf32>, vector<4x128xf32>, vector<128x128xf32> -> vector<128x128xf32>
    %c0_3 = arith.constant 0 : index
    %c0_4 = arith.constant 0 : index
    %3 = vector.load %arg3[%c0_3, %c0_4] : memref<128x1xf32, #tpu.memory_space<vmem>>, vector<128x1xf32>
    %4 = vector.broadcast %3 : vector<128x1xf32> to vector<128x128xf32>
    %5 = arith.addf %2, %4 : vector<128x128xf32>
    %6 = math.tanh %5 : vector<128x128xf32>
    %c0_5 = arith.constant 0 : index
    %c0_6 = arith.constant 0 : index
    %c0_7 = arith.constant 0 : index
    %7 = vector.load %arg4[%c0_5, %c0_6, %c0_7] : memref<1x128x128xf32, #tpu.memory_space<vmem>>, vector<1x128x128xf32>
    %8 = vector.shape_cast %7 : vector<1x128x128xf32> to vector<128x128xf32>
    %cst_8 = arith.constant dense<0.000000e+00> : vector<128x128xf32>
    %9 = tpu.matmul %8, %6, %cst_8 {dimension_numbers = #tpu.dot_dimension_numbers<[1], [0], [0], [1], [0, 0, 1, 1], [], []>} : vector<128x128xf32>, vector<128x128xf32>, vector<128x128xf32> -> vector<128x128xf32>
    %c0_9 = arith.constant 0 : index
    %c0_10 = arith.constant 0 : index
    %c0_11 = arith.constant 0 : index
    %10 = vector.load %arg5[%c0_9, %c0_10, %c0_11] : memref<1x128x1xf32, #tpu.memory_space<vmem>>, vector<1x128x1xf32>
    %11 = vector.shape_cast %10 : vector<1x128x1xf32> to vector<128x1xf32>
    %12 = vector.broadcast %11 : vector<128x1xf32> to vector<128x128xf32>
    %13 = arith.addf %9, %12 : vector<128x128xf32>
    %14 = math.tanh %13 : vector<128x128xf32>
    %c0_12 = arith.constant 0 : index
    %c0_13 = arith.constant 0 : index
    %15 = vector.load %arg6[%c0_12, %c0_13] : memref<4x128xf32, #tpu.memory_space<vmem>>, vector<4x128xf32>
    %cst_14 = arith.constant dense<0.000000e+00> : vector<4x128xf32>
    %16 = tpu.matmul %15, %14, %cst_14 {dimension_numbers = #tpu.dot_dimension_numbers<[1], [0], [0], [1], [0, 0, 1, 1], [], []>} : vector<4x128xf32>, vector<128x128xf32>, vector<4x128xf32> -> vector<4x128xf32>
    %c0_15 = arith.constant 0 : index
    %c0_16 = arith.constant 0 : index
    %17 = vector.load %arg7[%c0_15, %c0_16] : memref<4x1xf32, #tpu.memory_space<vmem>>, vector<4x1xf32>
    %18 = vector.broadcast %17 : vector<4x1xf32> to vector<4x128xf32>
    %19 = arith.addf %16, %18 : vector<4x128xf32>
    %c0_17 = arith.constant 0 : index
    %c0_18 = arith.constant 0 : index
    %20 = vector.load %arg8[%c0_17, %c0_18] : memref<4x128xf32, #tpu.memory_space<vmem>>, vector<4x128xf32>
    tpu.vector_store %arg8[%c0_17, %c0_18], %19 {strides = array<i32>} : memref<4x128xf32, #tpu.memory_space<vmem>>, vector<4x128xf32>,
    return
  }
  func.func @transform_0(%arg0: i32) -> (i32, i32) {
    %c0_i32 = arith.constant 0 : i32
    %c0_i32_0 = arith.constant 0 : i32
    return %c0_i32, %arg0 : i32, i32
  }
  func.func @transform_1(%arg0: i32) -> (i32, i32) {
    %c0_i32 = arith.constant 0 : i32
    %c0_i32_0 = arith.constant 0 : i32
    %c0_i32_1 = arith.constant 0 : i32
    return %c0_i32, %c0_i32_0 : i32, i32
  }
  func.func @transform_2(%arg0: i32) -> (i32, i32) {
    %c0_i32 = arith.constant 0 : i32
    %c0_i32_0 = arith.constant 0 : i32
    %c0_i32_1 = arith.constant 0 : i32
    return %c0_i32, %c0_i32_0 : i32, i32
  }
  func.func @transform_3(%arg0: i32) -> (i32, i32, i32) {
    %c0_i32 = arith.constant 0 : i32
    %c0_i32_0 = arith.constant 0 : i32
    %c0_i32_1 = arith.constant 0 : i32
    %c0_i32_2 = arith.constant 0 : i32
    return %c0_i32, %c0_i32_0, %c0_i32_1 : i32, i32, i32
  }
  func.func @transform_4(%arg0: i32) -> (i32, i32, i32) {
    %c0_i32 = arith.constant 0 : i32
    %c0_i32_0 = arith.constant 0 : i32
    %c0_i32_1 = arith.constant 0 : i32
    %c0_i32_2 = arith.constant 0 : i32
    return %c0_i32, %c0_i32_0, %c0_i32_1 : i32, i32, i32
  }
  func.func @transform_5(%arg0: i32) -> (i32, i32) {
    %c0_i32 = arith.constant 0 : i32
    %c0_i32_0 = arith.constant 0 : i32
    %c0_i32_1 = arith.constant 0 : i32
    return %c0_i32, %c0_i32_0 : i32, i32
  }
  func.func @transform_6(%arg0: i32) -> (i32, i32) {
    %c0_i32 = arith.constant 0 : i32
    %c0_i32_0 = arith.constant 0 : i32
    %c0_i32_1 = arith.constant 0 : i32
    return %c0_i32, %c0_i32_0 : i32, i32
  }
  func.func @transform_7(%arg0: i32) -> (i32, i32) {
    %c0_i32 = arith.constant 0 : i32
    %c0_i32_0 = arith.constant 0 : i32
    return %c0_i32, %arg0 : i32, i32
  }
}

</mosaic_0001>

<llo_original>
// kernel: tpu_custom_call.1
$region0: #{tpu_custom_call.1}
  #allocation0 [shape = 'u32[]', space=smem, size = 0x4, offset = 0x4, fixed_abs, tag = 'smem constant byte address 0x4 - core index']
  #allocation1 [shape = 'u32[72,128]{1,0:T(1,128)}', space=vmem, size = 0x9000, scoped, tag = 'internal scratch']
  %s0 = inlined_call_operand.vmem [shape: f32[4,128], index: 0, kind: input, shape index: {}]
  %s1 = inlined_call_operand.vmem [shape: f32[128,4], index: 1, kind: input, shape index: {}]
  %s2 = inlined_call_operand.vmem [shape: f32[128,1], index: 2, kind: input, shape index: {}]
  %s3 = inlined_call_operand.vmem [shape: f32[1,128,128], index: 3, kind: input, shape index: {}]
  %s4 = inlined_call_operand.vmem [shape: f32[1,128,1], index: 4, kind: input, shape index: {}]
  %s5 = inlined_call_operand.vmem [shape: f32[4,128], index: 5, kind: input, shape index: {}]
  %s6 = inlined_call_operand.vmem [shape: f32[4,1], index: 6, kind: input, shape index: {}]
  %s7 = inlined_call_operand.hbm [shape: f32[4,128], index: 7, kind: output, shape index: {}]
  %s8 = sld [smem:[#allocation0]]
  $region38: #{tpu_custom_call.1} parent=0
    _
  %s10 = ssub.s32 1, %s8
  %s11 = scalar_select 0, %s10, %s8
  $region1: #{tpu_custom_call.1} parent=0
    #allocation2 [shape = 'u8[2048]{0}', space=vmem, size = 0x800, scoped, tag = 'output window, operand 0, single buffered']
    #allocation3 [shape = 's32[1]{0}', space=sflag, size = 0x4, scoped, tag = 'scoped memory for tpu_custom_call.1']
    %12 = vsyncpa [#allocation3], 0
    // Predicated region
    $region2: #{tpu_custom_call.1} parent=1 // pred_check
      _
    $region3: #{tpu_custom_call.1} parent=1 // pred_check_branch
      %14 = sbr.rel (0) target = $region5
    $region4: #{tpu_custom_call.1} parent=1 // pred_region
      _
    $region5: #{tpu_custom_call.1} parent=1 // pred_fallthru
      _
    // Predicated region
    $region6: #{tpu_custom_call.1} parent=1 // pred_check
      _
    $region7: #{tpu_custom_call.1} parent=1 // pred_check_branch
      %16 = sbr.rel (0) target = $region9
    $region8: #{tpu_custom_call.1} parent=1 // pred_region
      _
    $region9: #{tpu_custom_call.1} parent=1 // pred_fallthru
      _
    // Predicated region
    $region10: #{tpu_custom_call.1} parent=1 // pred_check
      _
    $region11: #{tpu_custom_call.1} parent=1 // pred_check_branch
      %18 = sbr.rel (0) target = $region13
    $region12: #{tpu_custom_call.1} parent=1 // pred_region
      _
    $region13: #{tpu_custom_call.1} parent=1 // pred_fallthru
      _
    // Predicated region
    $region14: #{tpu_custom_call.1} parent=1 // pred_check
      _
    $region15: #{tpu_custom_call.1} parent=1 // pred_check_branch
      %20 = sbr.rel (0) target = $region17
    $region16: #{tpu_custom_call.1} parent=1 // pred_region
      _
    $region17: #{tpu_custom_call.1} parent=1 // pred_fallthru
      _
    // Predicated region
    $region18: #{tpu_custom_call.1} parent=1 // pred_check
      _
    $region19: #{tpu_custom_call.1} parent=1 // pred_check_branch
      %22 = sbr.rel (0) target = $region21
    $region20: #{tpu_custom_call.1} parent=1 // pred_region
      _
    $region21: #{tpu_custom_call.1} parent=1 // pred_fallthru
      _
    // Predicated region
    $region22: #{tpu_custom_call.1} parent=1 // pred_check
      _
    $region23: #{tpu_custom_call.1} parent=1 // pred_check_branch
      %24 = sbr.rel (0) target = $region25
    $region24: #{tpu_custom_call.1} parent=1 // pred_region
      _
    $region25: #{tpu_custom_call.1} parent=1 // pred_fallthru
      _
    // Predicated region
    $region26: #{tpu_custom_call.1} parent=1 // pred_check
      _
    $region27: #{tpu_custom_call.1} parent=1 // pred_check_branch
      %26 = sbr.rel (0) target = $region29
    $region28: #{tpu_custom_call.1} parent=1 // pred_region
      _
    $region29: #{tpu_custom_call.1} parent=1 // pred_fallthru
      _
    %v27 = vld [vmem:[%s0] sm:$0xf]
    %v28 = vld [vmem:[%s1] sm:$0xff]
    %v29 = vld [vmem:[%s1 + $0x8] sm:$0xff]
    %v30 = vld [vmem:[%s1 + $0x10] sm:$0xff]
    %v31 = vld [vmem:[%s1 + $0x18] sm:$0xff]
    %v32 = vld [vmem:[%s1 + $0x20] sm:$0xff]
    %v33 = vld [vmem:[%s1 + $0x28] sm:$0xff]
    %v34 = vld [vmem:[%s1 + $0x30] sm:$0xff]
    %v35 = vld [vmem:[%s1 + $0x38] sm:$0xff]
    %v36 = vld [vmem:[%s1 + $0x40] sm:$0xff]
    %v37 = vld [vmem:[%s1 + $0x48] sm:$0xff]
    %v38 = vld [vmem:[%s1 + $0x50] sm:$0xff]
    %v39 = vld [vmem:[%s1 + $0x58] sm:$0xff]
    %v40 = vld [vmem:[%s1 + $0x60] sm:$0xff]
    %v41 = vld [vmem:[%s1 + $0x68] sm:$0xff]
    %v42 = vld [vmem:[%s1 + $0x70] sm:$0xff]
    %v43 = vld [vmem:[%s1 + $0x78] sm:$0xff]
    %v44 = vld [vmem:[%s2] sm:$0xff]
    %v45 = vld [vmem:[%s2 + $0x8] sm:$0xff]
    %v46 = vld [vmem:[%s2 + $0x10] sm:$0xff]
    %v47 = vld [vmem:[%s2 + $0x18] sm:$0xff]
    %v48 = vld [vmem:[%s2 + $0x20] sm:$0xff]
    %v49 = vld [vmem:[%s2 + $0x28] sm:$0xff]
    %v50 = vld [vmem:[%s2 + $0x30] sm:$0xff]
    %v51 = vld [vmem:[%s2 + $0x38] sm:$0xff]
    %v52 = vld [vmem:[%s2 + $0x40] sm:$0xff]
    %v53 = vld [vmem:[%s2 + $0x48] sm:$0xff]
    %v54 = vld [vmem:[%s2 + $0x50] sm:$0xff]
    %v55 = vld [vmem:[%s2 + $0x58] sm:$0xff]
    %v56 = vld [vmem:[%s2 + $0x60] sm:$0xff]
    %v57 = vld [vmem:[%s2 + $0x68] sm:$0xff]
    %v58 = vld [vmem:[%s2 + $0x70] sm:$0xff]
    %v59 = vld [vmem:[%s2 + $0x78] sm:$0xff]
    %61 = vset.pattern.permute.xlu0 0
    %62 = vperm.xlu0 %61, %v44
    %v63 = vpop.permute.xlu0 %62
    %66 = vset.pattern.permute.xlu0 0
    %67 = vperm.xlu0 %66, %v45
    %v68 = vpop.permute.xlu0 %67
    %71 = vset.pattern.permute.xlu0 0
    %72 = vperm.xlu0 %71, %v46
    %v73 = vpop.permute.xlu0 %72
    %76 = vset.pattern.permute.xlu0 0
    %77 = vperm.xlu0 %76, %v47
    %v78 = vpop.permute.xlu0 %77
    %81 = vset.pattern.permute.xlu0 0
    %82 = vperm.xlu0 %81, %v48
    %v83 = vpop.permute.xlu0 %82
    %86 = vset.pattern.permute.xlu0 0
    %87 = vperm.xlu0 %86, %v49
    %v88 = vpop.permute.xlu0 %87
    %91 = vset.pattern.permute.xlu0 0
    %92 = vperm.xlu0 %91, %v50
    %v93 = vpop.permute.xlu0 %92
    %96 = vset.pattern.permute.xlu0 0
    %97 = vperm.xlu0 %96, %v51
    %v98 = vpop.permute.xlu0 %97
    %101 = vset.pattern.permute.xlu0 0
    %102 = vperm.xlu0 %101, %v52
    %v103 = vpop.permute.xlu0 %102
    %106 = vset.pattern.permute.xlu0 0
    %107 = vperm.xlu0 %106, %v53
    %v108 = vpop.permute.xlu0 %107
    %111 = vset.pattern.permute.xlu0 0
    %112 = vperm.xlu0 %111, %v54
    %v113 = vpop.permute.xlu0 %112
    %116 = vset.pattern.permute.xlu0 0
    %117 = vperm.xlu0 %116, %v55
    %v118 = vpop.permute.xlu0 %117
    %121 = vset.pattern.permute.xlu0 0
    %122 = vperm.xlu0 %121, %v56
    %v123 = vpop.permute.xlu0 %122
    %126 = vset.pattern.permute.xlu0 0
    %127 = vperm.xlu0 %126, %v57
    %v128 = vpop.permute.xlu0 %127
    %131 = vset.pattern.permute.xlu0 0
    %132 = vperm.xlu0 %131, %v58
    %v133 = vpop.permute.xlu0 %132
    %136 = vset.pattern.permute.xlu0 0
    %137 = vperm.xlu0 %136, %v59
    %v138 = vpop.permute.xlu0 %137
    %vm140 = vcmask 31744
    %v142 = vsel %vm140, %v28, 0
    %v145 = vsel %vm140, %v29, 0
    %v148 = vsel %vm140, %v30, 0
    %v151 = vsel %vm140, %v31, 0
    %v154 = vsel %vm140, %v32, 0
    %v157 = vsel %vm140, %v33, 0
    %v160 = vsel %vm140, %v34, 0
    %v163 = vsel %vm140, %v35, 0
    %v166 = vsel %vm140, %v36, 0
    %v169 = vsel %vm140, %v37, 0
    %v172 = vsel %vm140, %v38, 0
    %v175 = vsel %vm140, %v39, 0
    %v178 = vsel %vm140, %v40, 0
    %v181 = vsel %vm140, %v41, 0
    %v184 = vsel %vm140, %v42, 0
    %v187 = vsel %vm140, %v43, 0
    %vm189 = vcmask 1043456
    %v191 = vsel %vm189, %v27, 0
    %193 = vmatpush.msra.mxu0 0.0
    %194 = vmatpush.msra.mxu0 0.0
    %195 = vmatpush.msra.mxu0 0.0
    %196 = vmatpush.msra.mxu0 0.0
    %197 = vmatpush.msra.mxu0 0.0
    %198 = vmatpush.msra.mxu0 0.0
    %199 = vmatpush.msra.mxu0 0.0
    %200 = vmatpush.msra.mxu0 0.0
    %201 = vmatpush.msra.mxu0 0.0
    %202 = vmatpush.msra.mxu0 0.0
    %203 = vmatpush.msra.mxu0 0.0
    %204 = vmatpush.msra.mxu0 0.0
    %205 = vmatpush.msra.mxu0 0.0
    %206 = vmatpush.msra.mxu0 0.0
    %207 = vmatpush.msra.mxu0 0.0
    %208 = vmatpush.msra.mxu0 %v191
    %209 = vmatmul.f32.gmra.mxu0 %v142
    %v210 = vpop.f32.mrf.mxu0
    %v211 = vadd.f32 %v63, %v210
    %212 = vmatmul.f32.gmra.mxu0 %v145
    %v213 = vpop.f32.mrf.mxu0
    %v214 = vadd.f32 %v68, %v213
    %215 = vmatmul.f32.gmra.mxu0 %v148
    %v216 = vpop.f32.mrf.mxu0
    %v217 = vadd.f32 %v73, %v216
    %218 = vmatmul.f32.gmra.mxu0 %v151
    %v219 = vpop.f32.mrf.mxu0
    %v220 = vadd.f32 %v78, %v219
    %221 = vmatmul.f32.gmra.mxu0 %v154
    %v222 = vpop.f32.mrf.mxu0
    %v223 = vadd.f32 %v83, %v222
    %224 = vmatmul.f32.gmra.mxu0 %v157
    %v225 = vpop.f32.mrf.mxu0
    %v226 = vadd.f32 %v88, %v225
    %227 = vmatmul.f32.gmra.mxu0 %v160
    %v228 = vpop.f32.mrf.mxu0
    %v229 = vadd.f32 %v93, %v228
    %230 = vmatmul.f32.gmra.mxu0 %v163
    %v231 = vpop.f32.mrf.mxu0
    %v232 = vadd.f32 %v98, %v231
    %233 = vmatmul.f32.gmra.mxu0 %v166
    %v234 = vpop.f32.mrf.mxu0
    %v235 = vadd.f32 %v103, %v234
    %236 = vmatmul.f32.gmra.mxu0 %v169
    %v237 = vpop.f32.mrf.mxu0
    %v238 = vadd.f32 %v108, %v237
    %239 = vmatmul.f32.gmra.mxu0 %v172
    %v240 = vpop.f32.mrf.mxu0
    %v241 = vadd.f32 %v113, %v240
    %242 = vmatmul.f32.gmra.mxu0 %v175
    %v243 = vpop.f32.mrf.mxu0
    %v244 = vadd.f32 %v118, %v243
    %245 = vmatmul.f32.gmra.mxu0 %v178
    %v246 = vpop.f32.mrf.mxu0
    %v247 = vadd.f32 %v123, %v246
    %248 = vmatmul.f32.gmra.mxu0 %v181
    %v249 = vpop.f32.mrf.mxu0
    %v250 = vadd.f32 %v128, %v249
    %251 = vmatmul.f32.gmra.mxu0 %v184
    %v252 = vpop.f32.mrf.mxu0
    %v253 = vadd.f32 %v133, %v252
    %254 = vmatmul.f32.gmra.mxu0 %v187
    %v255 = vpop.f32.mrf.mxu0
    %v256 = vadd.f32 %v138, %v255
    %257 = vdwg.mxu0
    %v258 = vtanh.pop %v211
    %v259 = vtanh.pop %v214
    %v260 = vtanh.pop %v217
    %v261 = vtanh.pop %v220
    %v262 = vtanh.pop %v223
    %v263 = vtanh.pop %v226
    %v264 = vtanh.pop %v229
    %v265 = vtanh.pop %v232
    %v266 = vtanh.pop %v235
    %v267 = vtanh.pop %v238
    %v268 = vtanh.pop %v241
    %v269 = vtanh.pop %v244
    %v270 = vtanh.pop %v247
    %v271 = vtanh.pop %v250
    %v272 = vtanh.pop %v253
    %v273 = vtanh.pop %v256
    %v274 = vld [vmem:[%s3] sm:$0xff]
    %v275 = vld [vmem:[%s3 + $0x8] sm:$0xff]
    %v276 = vld [vmem:[%s3 + $0x10] sm:$0xff]
    %v277 = vld [vmem:[%s3 + $0x18] sm:$0xff]
    %v278 = vld [vmem:[%s3 + $0x20] sm:$0xff]
    %v279 = vld [vmem:[%s3 + $0x28] sm:$0xff]
    %v280 = vld [vmem:[%s3 + $0x30] sm:$0xff]
    %v281 = vld [vmem:[%s3 + $0x38] sm:$0xff]
    %v282 = vld [vmem:[%s3 + $0x40] sm:$0xff]
    %v283 = vld [vmem:[%s3 + $0x48] sm:$0xff]
    %v284 = vld [vmem:[%s3 + $0x50] sm:$0xff]
    %v285 = vld [vmem:[%s3 + $0x58] sm:$0xff]
    %v286 = vld [vmem:[%s3 + $0x60] sm:$0xff]
    %v287 = vld [vmem:[%s3 + $0x68] sm:$0xff]
    %v288 = vld [vmem:[%s3 + $0x70] sm:$0xff]
    %v289 = vld [vmem:[%s3 + $0x78] sm:$0xff]
    %v290 = vld [vmem:[%s4] sm:$0xff]
    %v291 = vld [vmem:[%s4 + $0x8] sm:$0xff]
    %v292 = vld [vmem:[%s4 + $0x10] sm:$0xff]
    %v293 = vld [vmem:[%s4 + $0x18] sm:$0xff]
    %v294 = vld [vmem:[%s4 + $0x20] sm:$0xff]
    %v295 = vld [vmem:[%s4 + $0x28] sm:$0xff]
    %v296 = vld [vmem:[%s4 + $0x30] sm:$0xff]
    %v297 = vld [vmem:[%s4 + $0x38] sm:$0xff]
    %v298 = vld [vmem:[%s4 + $0x40] sm:$0xff]
    %v299 = vld [vmem:[%s4 + $0x48] sm:$0xff]
    %v300 = vld [vmem:[%s4 + $0x50] sm:$0xff]
    %v301 = vld [vmem:[%s4 + $0x58] sm:$0xff]
    %v302 = vld [vmem:[%s4 + $0x60] sm:$0xff]
    %v303 = vld [vmem:[%s4 + $0x68] sm:$0xff]
    %v304 = vld [vmem:[%s4 + $0x70] sm:$0xff]
    %v305 = vld [vmem:[%s4 + $0x78] sm:$0xff]
    %307 = vset.pattern.permute.xlu0 0
    %308 = vperm.xlu0 %307, %v290
    %v309 = vpop.permute.xlu0 %308
    %312 = vset.pattern.permute.xlu0 0
    %313 = vperm.xlu0 %312, %v291
    %v314 = vpop.permute.xlu0 %313
    %317 = vset.pattern.permute.xlu0 0
    %318 = vperm.xlu0 %317, %v292
    %v319 = vpop.permute.xlu0 %318
    %322 = vset.pattern.permute.xlu0 0
    %323 = vperm.xlu0 %322, %v293
    %v324 = vpop.permute.xlu0 %323
    %327 = vset.pattern.permute.xlu0 0
    %328 = vperm.xlu0 %327, %v294
    %v329 = vpop.permute.xlu0 %328
    %332 = vset.pattern.permute.xlu0 0
    %333 = vperm.xlu0 %332, %v295
    %v334 = vpop.permute.xlu0 %333
    %337 = vset.pattern.permute.xlu0 0
    %338 = vperm.xlu0 %337, %v296
    %v339 = vpop.permute.xlu0 %338
    %342 = vset.pattern.permute.xlu0 0
    %343 = vperm.xlu0 %342, %v297
    %v344 = vpop.permute.xlu0 %343
    %347 = vset.pattern.permute.xlu0 0
    %348 = vperm.xlu0 %347, %v298
    %v349 = vpop.permute.xlu0 %348
    %352 = vset.pattern.permute.xlu0 0
    %353 = vperm.xlu0 %352, %v299
    %v354 = vpop.permute.xlu0 %353
    %357 = vset.pattern.permute.xlu0 0
    %358 = vperm.xlu0 %357, %v300
    %v359 = vpop.permute.xlu0 %358
    %362 = vset.pattern.permute.xlu0 0
    %363 = vperm.xlu0 %362, %v301
    %v364 = vpop.permute.xlu0 %363
    %367 = vset.pattern.permute.xlu0 0
    %368 = vperm.xlu0 %367, %v302
    %v369 = vpop.permute.xlu0 %368
    %372 = vset.pattern.permute.xlu0 0
    %373 = vperm.xlu0 %372, %v303
    %v374 = vpop.permute.xlu0 %373
    %377 = vset.pattern.permute.xlu0 0
    %378 = vperm.xlu0 %377, %v304
    %v379 = vpop.permute.xlu0 %378
    %382 = vset.pattern.permute.xlu0 0
    %383 = vperm.xlu0 %382, %v305
    %v384 = vpop.permute.xlu0 %383
    %386 = vmatpush.msra.mxu0 %v273
    %387 = vmatpush.msra.mxu0 %v272
    %388 = vmatpush.msra.mxu0 %v271
    %389 = vmatpush.msra.mxu0 %v270
    %390 = vmatpush.msra.mxu0 %v269
    %391 = vmatpush.msra.mxu0 %v268
    %392 = vmatpush.msra.mxu0 %v267
    %393 = vmatpush.msra.mxu0 %v266
    %394 = vmatpush.msra.mxu0 %v265
    %395 = vmatpush.msra.mxu0 %v264
    %396 = vmatpush.msra.mxu0 %v263
    %397 = vmatpush.msra.mxu0 %v262
    %398 = vmatpush.msra.mxu0 %v261
    %399 = vmatpush.msra.mxu0 %v260
    %400 = vmatpush.msra.mxu0 %v259
    %401 = vmatpush.msra.mxu0 %v258
    %402 = vmatmul.f32.gmra.mxu0 %v274
    %v403 = vpop.f32.mrf.mxu0
    %v404 = vadd.f32 %v309, %v403
    %405 = vmatmul.f32.gmra.mxu0 %v275
    %v406 = vpop.f32.mrf.mxu0
    %v407 = vadd.f32 %v314, %v406
    %408 = vmatmul.f32.gmra.mxu0 %v276
    %v409 = vpop.f32.mrf.mxu0
    %v410 = vadd.f32 %v319, %v409
    %411 = vmatmul.f32.gmra.mxu0 %v277
    %v412 = vpop.f32.mrf.mxu0
    %v413 = vadd.f32 %v324, %v412
    %414 = vmatmul.f32.gmra.mxu0 %v278
    %v415 = vpop.f32.mrf.mxu0
    %v416 = vadd.f32 %v329, %v415
    %417 = vmatmul.f32.gmra.mxu0 %v279
    %v418 = vpop.f32.mrf.mxu0
    %v419 = vadd.f32 %v334, %v418
    %420 = vmatmul.f32.gmra.mxu0 %v280
    %v421 = vpop.f32.mrf.mxu0
    %v422 = vadd.f32 %v339, %v421
    %423 = vmatmul.f32.gmra.mxu0 %v281
    %v424 = vpop.f32.mrf.mxu0
    %v425 = vadd.f32 %v344, %v424
    %426 = vmatmul.f32.gmra.mxu0 %v282
    %v427 = vpop.f32.mrf.mxu0
    %v428 = vadd.f32 %v349, %v427
    %429 = vmatmul.f32.gmra.mxu0 %v283
    %v430 = vpop.f32.mrf.mxu0
    %v431 = vadd.f32 %v354, %v430
    %432 = vmatmul.f32.gmra.mxu0 %v284
    %v433 = vpop.f32.mrf.mxu0
    %v434 = vadd.f32 %v359, %v433
    %435 = vmatmul.f32.gmra.mxu0 %v285
    %v436 = vpop.f32.mrf.mxu0
    %v437 = vadd.f32 %v364, %v436
    %438 = vmatmul.f32.gmra.mxu0 %v286
    %v439 = vpop.f32.mrf.mxu0
    %v440 = vadd.f32 %v369, %v439
    %441 = vmatmul.f32.gmra.mxu0 %v287
    %v442 = vpop.f32.mrf.mxu0
    %v443 = vadd.f32 %v374, %v442
    %444 = vmatmul.f32.gmra.mxu0 %v288
    %v445 = vpop.f32.mrf.mxu0
    %v446 = vadd.f32 %v379, %v445
    %447 = vmatmul.f32.gmra.mxu0 %v289
    %v448 = vpop.f32.mrf.mxu0
    %v449 = vadd.f32 %v384, %v448
    %450 = vdwg.mxu0
    %v451 = vtanh.pop %v404
    %v452 = vtanh.pop %v407
    %v453 = vtanh.pop %v410
    %v454 = vtanh.pop %v413
    %v455 = vtanh.pop %v416
    %v456 = vtanh.pop %v419
    %v457 = vtanh.pop %v422
    %v458 = vtanh.pop %v425
    %v459 = vtanh.pop %v428
    %v460 = vtanh.pop %v431
    %v461 = vtanh.pop %v434
    %v462 = vtanh.pop %v437
    %v463 = vtanh.pop %v440
    %v464 = vtanh.pop %v443
    %v465 = vtanh.pop %v446
    %v466 = vtanh.pop %v449
    %v467 = vld [vmem:[%s5] sm:$0xf]
    %v468 = vld [vmem:[%s6] sm:$0xf]
    %470 = vset.pattern.permute.xlu0 0
    %471 = vperm.xlu0 %470, %v468
    %v472 = vpop.permute.xlu0 %471
    %474 = vmatpush.msra.mxu0 %v466
    %475 = vmatpush.msra.mxu0 %v465
    %476 = vmatpush.msra.mxu0 %v464
    %477 = vmatpush.msra.mxu0 %v463
    %478 = vmatpush.msra.mxu0 %v462
    %479 = vmatpush.msra.mxu0 %v461
    %480 = vmatpush.msra.mxu0 %v460
    %481 = vmatpush.msra.mxu0 %v459
    %482 = vmatpush.msra.mxu0 %v458
    %483 = vmatpush.msra.mxu0 %v457
    %484 = vmatpush.msra.mxu0 %v456
    %485 = vmatpush.msra.mxu0 %v455
    %486 = vmatpush.msra.mxu0 %v454
    %487 = vmatpush.msra.mxu0 %v453
    %488 = vmatpush.msra.mxu0 %v452
    %489 = vmatpush.msra.mxu0 %v451
    %490 = vmatmul.f32.gmra.mxu0 %v467
    %v491 = vpop.f32.mrf.mxu0
    %v492 = vadd.f32 %v472, %v491
    %493 = vdwg.mxu0
    %494 = vst [vmem:[#allocation2] sm:$0xf] %v492
    // Predicated region
    $region30: #{tpu_custom_call.1} parent=1 // pred_check
      _
    $region31: #{tpu_custom_call.1} parent=1 // pred_check_branch
      %496 = sbr.rel (0) target = $region33
    $region32: #{tpu_custom_call.1} parent=1 // pred_region
      %498 = vsyncadd [#allocation3], 0
      %s500 = sshll.u32 [#allocation2], 4
      %s501 = int_to_ptr.vmem [resolvable:$true] %s500
      %s502 = sshll.u32 %s7, 4
      %s503 = int_to_ptr.hbm [resolvable:$true] %s502
      %505 = dma.vmem_to_hbm [thread:$0]  %s501, 64, %s503, [#allocation3]
    $region33: #{tpu_custom_call.1} parent=1 // pred_fallthru
      _
    // Predicated region
    $region34: #{tpu_custom_call.1} parent=1 // pred_check
      _
    $region35: #{tpu_custom_call.1} parent=1 // pred_check_branch
      %507 = sbr.rel (0) target = $region37
    $region36: #{tpu_custom_call.1} parent=1 // pred_region
      %509 = dma.done [#allocation3], 64
    $region37: #{tpu_custom_call.1} parent=1 // pred_fallthru
      _
    %510 = vsyncpa [#allocation3], 1

</llo_original>
